<compile_context>
chip_gen: v5e
topology: v5e:2x2
jax: 0.10.0
libtpu: 0.0.40
codegen_flags: <defaults>
</compile_context>

<pallas_src>
import jax
import jax.numpy as jnp
from jax.experimental import pallas as pl
from jax.experimental.pallas import tpu as pltpu

LANE = 128


def _round_up(x, m):
    return ((x + m - 1) // m) * m


def _phys_vmem_bytes(rows, cols, dtype):
    """Conservative physical VMEM footprint of a (rows, cols) buffer."""
    itemsize = jnp.dtype(dtype).itemsize
    packing = max(1, 4 // itemsize)  # sub-32-bit dtypes pack along sublanes
    return (_round_up(max(rows, 1), 8 * packing)
            * _round_up(max(cols, 1), LANE) * itemsize)


def cox_pasnet_kernel(w4x_ref,   # SMEM (1, 1)  f32 : weight applied to x_2
                      x1_ref,    # VMEM (tm, In)        stored dtype (streamed)
                      x2_ref,    # VMEM (tm, 1)  f32    (streamed)
                      w1t_ref,   # VMEM (In, Hid_p)     bf16, resident == sc1.weight.T
                      b1_ref,    # VMEM (1, Hid_p)      f32,  resident == sc1.bias
                      w3t_ref,   # VMEM (Hid_p, Out_p)  bf16, resident == sc3.weight.T
                      w4z_ref,   # VMEM (1, Out_p)      f32,  resident == sc4.weight[:, :Out]
                      out_ref):  # VMEM (tm, 1)  f32
    # Cast the streamed x1 tile to the MXU dtype in-kernel (no padded bf16
    # copy of the dominant HBM stream in the wrapper).
    x1 = x1_ref[...].astype(w1t_ref.dtype)
    # sc1 + tanh: bf16 operands on the MXU, f32 accumulation, f32 activation.
    h = jnp.tanh(
        jnp.dot(x1, w1t_ref[...], preferred_element_type=jnp.float32)
        + b1_ref[...]
    )
    # (training-mode do_m2 multiply skipped: mask is all-ones -> identity)
    # sc3 (no bias) + tanh.
    z = jnp.tanh(
        jnp.dot(h.astype(w3t_ref.dtype), w3t_ref[...],
                preferred_element_type=jnp.float32)
    )
    # sc4 on concat([z, x_2])  ==  lane-reduce(z * w4_z) + x_2 * w4_x.
    # VPU mul + XLU reduce instead of a tiny (tm,Out)@(Out,1) MXU matmul.
    lin = (jnp.sum(z * w4z_ref[...], axis=-1, keepdims=True)
           + x2_ref[...] * w4x_ref[0, 0])
    out_ref[...] = lin


def cox_pasnet_forward(x1, x2, w1, b1, w3, w4, *,
                       block_n=512, compute_dtype=jnp.bfloat16,
                       vmem_limit_bytes=None):
    """x1: (N, In), x2: (N, 1); w1: (Hidden, In), b1: (Hidden,),
    w3: (Out, Hidden), w4: (1, Out+1). Returns (N, 1) float32."""
    N, In = x1.shape
    Hidden = w1.shape[0]
    Out = w3.shape[0]

    Hid_p = _round_up(Hidden, LANE)
    Out_p = _round_up(Out, LANE)

    f32 = jnp.float32
    # Only the small weights/bias are explicitly zero-padded (exact: tanh(0)=0,
    # zero rows/columns contribute nothing). x1 is streamed as-is.
    w1t = (jnp.zeros((In, Hid_p), f32)
           .at[:, :Hidden].set(w1.T.astype(f32)).astype(compute_dtype))
    b1r = jnp.zeros((1, Hid_p), f32).at[:, :Hidden].set(b1.astype(f32))
    w3t = (jnp.zeros((Hid_p, Out_p), f32)
           .at[:Hidden, :Out].set(w3.T.astype(f32)).astype(compute_dtype))
    w4z = jnp.zeros((1, Out_p), f32).at[:, :Out].set(w4[:, :Out].astype(f32))
    w4x = w4[:, Out:].reshape(1, 1).astype(f32)          # scalar -> SMEM
    x2 = x2.astype(f32)

    # Batch tile: whole batch when N <= 8 (block == full dim is legal);
    # otherwise a multiple of 8 sublanes with >= 2 grid steps so v7x's two
    # TensorCores both get work.  Partial edge tiles are handled by Pallas
    # (row-wise independent compute; OOB output rows are never written back).
    if N <= 8:
        tm = N
    else:
        bn = max(8, (block_n // 8) * 8)
        tm = min(bn, _round_up(N, 8))
        if pl.cdiv(N, tm) < 2:
            tm = _round_up(pl.cdiv(N, 2), 8)
    grid = (pl.cdiv(N, tm),)

    # Explicit VMEM budget from the actual buffers (x1/x2/out double-buffered,
    # weights single-buffered, plus room for h/z temporaries).
    if vmem_limit_bytes is None:
        needed = (
            2 * _phys_vmem_bytes(tm, In, x1.dtype)          # x1 tile x 2 bufs
            + 2 * _phys_vmem_bytes(tm, 1, f32)              # x2 tile x 2 bufs
            + 2 * _phys_vmem_bytes(tm, 1, f32)              # out tile x 2 bufs
            + _phys_vmem_bytes(In, Hid_p, compute_dtype)    # w1t (resident)
            + _phys_vmem_bytes(1, Hid_p, f32)               # b1
            + _phys_vmem_bytes(Hid_p, Out_p, compute_dtype) # w3t
            + _phys_vmem_bytes(1, Out_p, f32)               # w4z
            + 2 * _phys_vmem_bytes(tm, Hid_p, f32)          # h + slack
            + _phys_vmem_bytes(tm, Out_p, f32))             # z
        vmem_limit_bytes = int(needed * 1.25) + (2 << 20)
        vmem_limit_bytes = min(max(vmem_limit_bytes, 32 << 20), 127 << 20)

    isz_x1 = jnp.dtype(x1.dtype).itemsize
    isz_c = jnp.dtype(compute_dtype).itemsize
    cost = pl.CostEstimate(
        flops=2 * N * (In * Hid_p + Hid_p * Out_p) + 3 * N * Out_p,
        transcendentals=N * (Hid_p + Out_p),
        bytes_accessed=(N * In * isz_x1 + N * 4                  # x1, x2
                        + In * Hid_p * isz_c + Hid_p * 4         # w1t, b1
                        + Hid_p * Out_p * isz_c + Out_p * 4 + 4  # w3t, w4z, w4x
                        + N * 4),                                # output
    )

    vmem = pltpu.MemorySpace.VMEM
    out = pl.pallas_call(
        cox_pasnet_kernel,
        out_shape=jax.ShapeDtypeStruct((N, 1), jnp.float32),
        grid=grid,
        in_specs=[
            pl.BlockSpec(memory_space=pltpu.MemorySpace.SMEM),  # w4x scalar
            pl.BlockSpec((tm, In), lambda i: (i, 0)),           # x1 batch tile
            pl.BlockSpec((tm, 1), lambda i: (i, 0)),            # x2 batch tile
            pl.BlockSpec(memory_space=vmem),                    # w1t (resident, 1 buf)
            pl.BlockSpec(memory_space=vmem),                    # b1
            pl.BlockSpec(memory_space=vmem),                    # w3t
            pl.BlockSpec(memory_space=vmem),                    # w4z
        ],
        out_specs=pl.BlockSpec((tm, 1), lambda i: (i, 0)),
        compiler_params=pltpu.CompilerParams(
            dimension_semantics=("parallel",),
            vmem_limit_bytes=vmem_limit_bytes,
        ),
        cost_estimate=cost,
    )(w4x, x1, x2, w1t, b1r, w3t, w4z)
    return out


def reference_forward(x1, x2, w1, b1, w3, w4, dtype=jnp.float32):
    """Pure-JAX reference. `dtype` controls matmul operand precision so a
    matched-precision (bf16-operand / f32-accumulate) comparison is possible."""
    h = jnp.tanh(
        jnp.dot(x1.astype(dtype), w1.T.astype(dtype),
                preferred_element_type=jnp.float32) + b1)
    z = jnp.tanh(
        jnp.dot(h.astype(dtype), w3.T.astype(dtype),
                preferred_element_type=jnp.float32))
    cat = jnp.concatenate([z, x2], axis=1)
    return cat @ w4.T


if __name__ == "__main__":
    # Small shapes consistent with the module.
    N, In_Nodes, Hidden_Nodes, Out_Nodes = 8, 16, 32, 8

    key = jax.random.PRNGKey(0)
    k_x1, k_x2, k_w1, k_b1, k_w3, k_w4 = jax.random.split(key, 6)

    # Deterministic parameter init mimicking nn.Linear defaults.
    bound1 = 1.0 / jnp.sqrt(In_Nodes)
    w1 = jax.random.uniform(k_w1, (Hidden_Nodes, In_Nodes),
                            minval=-bound1, maxval=bound1, dtype=jnp.float32)
    b1 = jax.random.uniform(k_b1, (Hidden_Nodes,),
                            minval=-bound1, maxval=bound1, dtype=jnp.float32)
    bound3 = 1.0 / jnp.sqrt(Hidden_Nodes)
    w3 = jax.random.uniform(k_w3, (Out_Nodes, Hidden_Nodes),
                            minval=-bound3, maxval=bound3, dtype=jnp.float32)
    # sc4.weight.data.uniform_(-0.001, 0.001)
    w4 = jax.random.uniform(k_w4, (1, Out_Nodes + 1),
                            minval=-0.001, maxval=0.001, dtype=jnp.float32)

    x1 = jax.random.normal(k_x1, (N, In_Nodes), dtype=jnp.float32)
    x2 = jax.random.normal(k_x2, (N, 1), dtype=jnp.float32)

    out = cox_pasnet_forward(x1, x2, w1, b1, w3, w4)
    out = jax.block_until_ready(out)
    assert out.shape == (N, 1)

    # Primary check: matched-precision (bf16 operands, f32 accumulation).
    ref_bf16 = reference_forward(x1, x2, w1, b1, w3, w4, dtype=jnp.bfloat16)
    assert jnp.allclose(out, ref_bf16, atol=1e-5, rtol=1e-4), (
        jnp.max(jnp.abs(out - ref_bf16)))

    # Sanity check against the full-f32 reference (loose: bf16 MXU operands).
    ref_f32 = reference_forward(x1, x2, w1, b1, w3, w4, dtype=jnp.float32)
    assert jnp.allclose(out, ref_f32, atol=1e-3, rtol=1e-2), (
        jnp.max(jnp.abs(out - ref_f32)))

    print("KERNEL_OK")
</pallas_src>

<mosaic_0001>
module attributes {stable_mosaic.version = 11 : i64} {
  func.func @cox_pasnet_kernel(%arg0: i32, %arg1: memref<1x1xf32, #tpu.memory_space<smem>>, %arg2: memref<8x16xf32, #tpu.memory_space<vmem>>, %arg3: memref<8x1xf32, #tpu.memory_space<vmem>>, %arg4: memref<16x128xbf16, #tpu.memory_space<vmem>>, %arg5: memref<1x128xf32, #tpu.memory_space<vmem>>, %arg6: memref<128x128xbf16, #tpu.memory_space<vmem>>, %arg7: memref<1x128xf32, #tpu.memory_space<vmem>>, %arg8: memref<8x1xf32, #tpu.memory_space<vmem>>) attributes {dimension_semantics = [#tpu.dimension_semantics<parallel>], iteration_bounds = array<i64: 1>, scalar_prefetch = 0 : i64, scratch_operands = 0 : i64, tpu.core_type = #tpu.core_type<tc>, window_params = [{transform_indices = @transform_0, window_bounds = array<i64: 1, 1>}, {transform_indices = @transform_1, window_bounds = array<i64: 8, 16>}, {transform_indices = @transform_2, window_bounds = array<i64: 8, 1>}, {pipeline_mode = #tpu.pipeline_mode<synchronous>, transform_indices = @transform_3, window_bounds = array<i64: 16, 128>}, {pipeline_mode = #tpu.pipeline_mode<synchronous>, transform_indices = @transform_4, window_bounds = array<i64: 1, 128>}, {pipeline_mode = #tpu.pipeline_mode<synchronous>, transform_indices = @transform_5, window_bounds = array<i64: 128, 128>}, {pipeline_mode = #tpu.pipeline_mode<synchronous>, transform_indices = @transform_6, window_bounds = array<i64: 1, 128>}, {transform_indices = @transform_7, window_bounds = array<i64: 8, 1>}]} {
    %c0 = arith.constant 0 : index
    %c0_0 = arith.constant 0 : index
    %0 = vector.load %arg2[%c0, %c0_0] : memref<8x16xf32, #tpu.memory_space<vmem>>, vector<8x16xf32>
    %1 = arith.truncf %0 : vector<8x16xf32> to vector<8x16xbf16>
    %c0_1 = arith.constant 0 : index
    %c0_2 = arith.constant 0 : index
    %2 = vector.load %arg4[%c0_1, %c0_2] : memref<16x128xbf16, #tpu.memory_space<vmem>>, vector<16x128xbf16>
    %cst = arith.constant dense<0.000000e+00> : vector<8x128xf32>
    %3 = tpu.matmul %1, %2, %cst {dimension_numbers = #tpu.dot_dimension_numbers<[1], [0], [0], [1], [0, 0, 1, 1], [], []>} : vector<8x16xbf16>, vector<16x128xbf16>, vector<8x128xf32> -> vector<8x128xf32>
    %c0_3 = arith.constant 0 : index
    %c0_4 = arith.constant 0 : index
    %4 = vector.load %arg5[%c0_3, %c0_4] : memref<1x128xf32, #tpu.memory_space<vmem>>, vector<1x128xf32>
    %5 = vector.broadcast %4 : vector<1x128xf32> to vector<8x128xf32>
    %6 = arith.addf %3, %5 : vector<8x128xf32>
    %7 = math.tanh %6 : vector<8x128xf32>
    %8 = arith.truncf %7 : vector<8x128xf32> to vector<8x128xbf16>
    %c0_5 = arith.constant 0 : index
    %c0_6 = arith.constant 0 : index
    %9 = vector.load %arg6[%c0_5, %c0_6] : memref<128x128xbf16, #tpu.memory_space<vmem>>, vector<128x128xbf16>
    %cst_7 = arith.constant dense<0.000000e+00> : vector<8x128xf32>
    %10 = tpu.matmul %8, %9, %cst_7 {dimension_numbers = #tpu.dot_dimension_numbers<[1], [0], [0], [1], [0, 0, 1, 1], [], []>} : vector<8x128xbf16>, vector<128x128xbf16>, vector<8x128xf32> -> vector<8x128xf32>
    %11 = math.tanh %10 : vector<8x128xf32>
    %c0_8 = arith.constant 0 : index
    %c0_9 = arith.constant 0 : index
    %12 = vector.load %arg7[%c0_8, %c0_9] : memref<1x128xf32, #tpu.memory_space<vmem>>, vector<1x128xf32>
    %13 = vector.broadcast %12 : vector<1x128xf32> to vector<8x128xf32>
    %14 = arith.mulf %11, %13 : vector<8x128xf32>
    %cst_10 = arith.constant dense<0.000000e+00> : vector<8xf32>
    %15 = vector.multi_reduction <add>, %14, %cst_10 [1] : vector<8x128xf32> to vector<8xf32>
    %16 = vector.shape_cast %15 : vector<8xf32> to vector<8x1xf32>
    %c0_11 = arith.constant 0 : index
    %c0_12 = arith.constant 0 : index
    %17 = vector.load %arg3[%c0_11, %c0_12] : memref<8x1xf32, #tpu.memory_space<vmem>>, vector<8x1xf32>
    %c0_13 = arith.constant 0 : index
    %c0_14 = arith.constant 0 : index
    %18 = memref.load %arg1[%c0_13, %c0_14] : memref<1x1xf32, #tpu.memory_space<smem>>
    %19 = vector.broadcast %18 : f32 to vector<8x1xf32>
    %20 = arith.mulf %17, %19 : vector<8x1xf32>
    %21 = arith.addf %16, %20 : vector<8x1xf32>
    %c0_15 = arith.constant 0 : index
    %c0_16 = arith.constant 0 : index
    %22 = vector.load %arg8[%c0_15, %c0_16] : memref<8x1xf32, #tpu.memory_space<vmem>>, vector<8x1xf32>
    tpu.vector_store %arg8[%c0_15, %c0_16], %21 {strides = array<i32>} : memref<8x1xf32, #tpu.memory_space<vmem>>, vector<8x1xf32>,
    return
  }
  func.func @transform_0(%arg0: i32) -> (i32, i32) {
    %c0_i32 = arith.constant 0 : i32
    %c0_i32_0 = arith.constant 0 : i32
    %c0_i32_1 = arith.constant 0 : i32
    return %c0_i32, %c0_i32_0 : i32, i32
  }
  func.func @transform_1(%arg0: i32) -> (i32, i32) {
    %c0_i32 = arith.constant 0 : i32
    %c0_i32_0 = arith.constant 0 : i32
    return %arg0, %c0_i32 : i32, i32
  }
  func.func @transform_2(%arg0: i32) -> (i32, i32) {
    %c0_i32 = arith.constant 0 : i32
    %c0_i32_0 = arith.constant 0 : i32
    return %arg0, %c0_i32 : i32, i32
  }
  func.func @transform_3(%arg0: i32) -> (i32, i32) {
    %c0_i32 = arith.constant 0 : i32
    %c0_i32_0 = arith.constant 0 : i32
    %c0_i32_1 = arith.constant 0 : i32
    return %c0_i32, %c0_i32_0 : i32, i32
  }
  func.func @transform_4(%arg0: i32) -> (i32, i32) {
    %c0_i32 = arith.constant 0 : i32
    %c0_i32_0 = arith.constant 0 : i32
    %c0_i32_1 = arith.constant 0 : i32
    return %c0_i32, %c0_i32_0 : i32, i32
  }
  func.func @transform_5(%arg0: i32) -> (i32, i32) {
    %c0_i32 = arith.constant 0 : i32
    %c0_i32_0 = arith.constant 0 : i32
    %c0_i32_1 = arith.constant 0 : i32
    return %c0_i32, %c0_i32_0 : i32, i32
  }
  func.func @transform_6(%arg0: i32) -> (i32, i32) {
    %c0_i32 = arith.constant 0 : i32
    %c0_i32_0 = arith.constant 0 : i32
    %c0_i32_1 = arith.constant 0 : i32
    return %c0_i32, %c0_i32_0 : i32, i32
  }
  func.func @transform_7(%arg0: i32) -> (i32, i32) {
    %c0_i32 = arith.constant 0 : i32
    %c0_i32_0 = arith.constant 0 : i32
    return %arg0, %c0_i32 : i32, i32
  }
}

</mosaic_0001>

<llo_original>
// kernel: tpu_custom_call.1
$region0: #{tpu_custom_call.1}
  #allocation0 [shape = 'u32[]', space=smem, size = 0x4, offset = 0x4, fixed_abs, tag = 'smem constant byte address 0x4 - core index']
  #allocation1 [shape = 'u32[72,128]{1,0:T(1,128)}', space=vmem, size = 0x9000, scoped, tag = 'internal scratch']
  #allocation2 [shape = 'f32[1,1]{1,0:T(1,128)S(6)}', space=smem, size = 0x200, scoped, tag = 'scoped memory for tpu_custom_call.1']
  %s0 = inlined_call_operand.<no memory space> [shape: f32[1,1], index: 0, kind: input, shape index: {}]
  %s1 = inlined_call_operand.vmem [shape: f32[8,16], index: 1, kind: input, shape index: {}]
  %s2 = inlined_call_operand.vmem [shape: f32[8,1], index: 2, kind: input, shape index: {}]
  %s3 = inlined_call_operand.hbm [shape: bf16[16,128], index: 3, kind: input, shape index: {}]
  %s4 = inlined_call_operand.vmem [shape: f32[1,128], index: 4, kind: input, shape index: {}]
  %s5 = inlined_call_operand.hbm [shape: bf16[128,128], index: 5, kind: input, shape index: {}]
  %s6 = inlined_call_operand.vmem [shape: f32[1,128], index: 6, kind: input, shape index: {}]
  %s7 = inlined_call_operand.vmem [shape: f32[8,1], index: 7, kind: output, shape index: {}]
  %s8 = sld [smem:[#allocation0]]
  $region46: #{tpu_custom_call.1} parent=0
    _
  %s10 = ssub.s32 1, %s8
  %s11 = scalar_select 0, %s10, %s8
  %12 = sst [smem:[#allocation2]] %s0
  $region1: #{tpu_custom_call.1} parent=0
    #allocation3 [shape = 'u8[4096]{0}', space=vmem, size = 0x1000, scoped, tag = 'input window, operand 3, single buffered']
    #allocation4 [shape = 's32[1]{0}', space=sflag, size = 0x4, scoped, tag = 'scoped memory for tpu_custom_call.1']
    #allocation5 [shape = 'u8[32768]{0}', space=vmem, size = 0x8000, scoped, tag = 'input window, operand 5, single buffered']
    #allocation6 [shape = 's32[1]{0}', space=sflag, size = 0x4, scoped, tag = 'scoped memory for tpu_custom_call.1']
    %13 = vsyncpa [#allocation4], 0
    %14 = vsyncpa [#allocation6], 0
    // Predicated region
    $region2: #{tpu_custom_call.1} parent=1 // pred_check
      _
    $region3: #{tpu_custom_call.1} parent=1 // pred_check_branch
      %16 = sbr.rel (0) target = $region5
    $region4: #{tpu_custom_call.1} parent=1 // pred_region
      _
    $region5: #{tpu_custom_call.1} parent=1 // pred_fallthru
      _
    // Predicated region
    $region6: #{tpu_custom_call.1} parent=1 // pred_check
      _
    $region7: #{tpu_custom_call.1} parent=1 // pred_check_branch
      %18 = sbr.rel (0) target = $region9
    $region8: #{tpu_custom_call.1} parent=1 // pred_region
      _
    $region9: #{tpu_custom_call.1} parent=1 // pred_fallthru
      _
    // Predicated region
    $region10: #{tpu_custom_call.1} parent=1 // pred_check
      _
    $region11: #{tpu_custom_call.1} parent=1 // pred_check_branch
      %20 = sbr.rel (0) target = $region13
    $region12: #{tpu_custom_call.1} parent=1 // pred_region
      _
    $region13: #{tpu_custom_call.1} parent=1 // pred_fallthru
      _
    // Predicated region
    $region14: #{tpu_custom_call.1} parent=1 // pred_check
      _
    $region15: #{tpu_custom_call.1} parent=1 // pred_check_branch
      %22 = sbr.rel (0) target = $region17
    $region16: #{tpu_custom_call.1} parent=1 // pred_region
      %24 = vsyncadd [#allocation4], 0
      %s25 = sshll.u32 %s3, 4
      %s26 = int_to_ptr.hbm [resolvable:$true] %s25
      %s27 = sshll.u32 [#allocation3], 4
      %s28 = int_to_ptr.vmem [resolvable:$true] %s27
      %33 = dma.hbm_to_vmem [thread:$0]  %s26, 128, %s28, [#allocation4], 64, 64, 4
    $region17: #{tpu_custom_call.1} parent=1 // pred_fallthru
      _
    // Predicated region
    $region18: #{tpu_custom_call.1} parent=1 // pred_check
      _
    $region19: #{tpu_custom_call.1} parent=1 // pred_check_branch
      %35 = sbr.rel (0) target = $region21
    $region20: #{tpu_custom_call.1} parent=1 // pred_region
      _
    $region21: #{tpu_custom_call.1} parent=1 // pred_fallthru
      _
    // Predicated region
    $region22: #{tpu_custom_call.1} parent=1 // pred_check
      _
    $region23: #{tpu_custom_call.1} parent=1 // pred_check_branch
      %37 = sbr.rel (0) target = $region25
    $region24: #{tpu_custom_call.1} parent=1 // pred_region
      %39 = vsyncadd [#allocation6], 0
      %s40 = sshll.u32 %s5, 4
      %s41 = int_to_ptr.hbm [resolvable:$true] %s40
      %s42 = sshll.u32 [#allocation5], 4
      %s43 = int_to_ptr.vmem [resolvable:$true] %s42
      %48 = dma.hbm_to_vmem [thread:$0]  %s41, 1024, %s43, [#allocation6], 64, 64, 4
    $region25: #{tpu_custom_call.1} parent=1 // pred_fallthru
      _
    // Predicated region
    $region26: #{tpu_custom_call.1} parent=1 // pred_check
      _
    $region27: #{tpu_custom_call.1} parent=1 // pred_check_branch
      %50 = sbr.rel (0) target = $region29
    $region28: #{tpu_custom_call.1} parent=1 // pred_region
      _
    $region29: #{tpu_custom_call.1} parent=1 // pred_fallthru
      _
    // Predicated region
    $region30: #{tpu_custom_call.1} parent=1 // pred_check
      _
    $region31: #{tpu_custom_call.1} parent=1 // pred_check_branch
      %52 = sbr.rel (0) target = $region33
    $region32: #{tpu_custom_call.1} parent=1 // pred_region
      %54 = dma.done [#allocation4], 128
    $region33: #{tpu_custom_call.1} parent=1 // pred_fallthru
      _
    // Predicated region
    $region34: #{tpu_custom_call.1} parent=1 // pred_check
      _
    $region35: #{tpu_custom_call.1} parent=1 // pred_check_branch
      %56 = sbr.rel (0) target = $region37
    $region36: #{tpu_custom_call.1} parent=1 // pred_region
      %58 = dma.done [#allocation6], 1024
    $region37: #{tpu_custom_call.1} parent=1 // pred_fallthru
      _
    %v60 = vld [vmem:[%s1] sm:$0xff]
    %v61 = vpack.c.bf16 %v60, %v60
    %v62 = vld [vmem:[#allocation3] sm:$0xf]
    %v63 = vld [vmem:[#allocation3 + $0x4] sm:$0xf]
    %v64 = vld [vmem:[%s4] sm:$0x1]
    %v66 = vperm.slane %v64, 0
    %v70 = vunpack.c.l.b16 %v62
    %v71 = vunpack.c.l.b16 %v63
    %v72 = vpack.c.b16 %v71, %v70
    %vm74 = vcmask 130048
    %v76 = vsel %vm74, %v61, 0
    %78 = vmatpush.bf16.msra.mxu0 0
    %79 = vmatpush.bf16.msra.mxu0 0
    %80 = vmatpush.bf16.msra.mxu0 0
    %81 = vmatpush.bf16.msra.mxu0 0
    %82 = vmatpush.bf16.msra.mxu0 0
    %83 = vmatpush.bf16.msra.mxu0 0
    %84 = vmatpush.bf16.msra.mxu0 0
    %85 = vmatpush.bf16.msra.mxu0 %v72
    %86 = vmatmul.bf16.gmra.mxu0 %v76
    %v87 = vpop.f32.mrf.mxu0
    %v88 = vadd.f32 %v66, %v87
    %v89 = vpop.f32.mrf.mxu0
    %90 = vdwg.mxu0
    %v91 = vtanh.pop %v88
    %v92 = vpack.c.bf16 %v91, %v91
    %v93 = vld [vmem:[#allocation5] sm:$0xf]
    %v94 = vld [vmem:[#allocation5 + $0x4] sm:$0xf]
    %v95 = vld [vmem:[#allocation5 + $0x8] sm:$0xf]
    %v96 = vld [vmem:[#allocation5 + $0xc] sm:$0xf]
    %v97 = vld [vmem:[#allocation5 + $0x10] sm:$0xf]
    %v98 = vld [vmem:[#allocation5 + $0x14] sm:$0xf]
    %v99 = vld [vmem:[#allocation5 + $0x18] sm:$0xf]
    %v100 = vld [vmem:[#allocation5 + $0x1c] sm:$0xf]
    %v101 = vld [vmem:[#allocation5 + $0x20] sm:$0xf]
    %v102 = vld [vmem:[#allocation5 + $0x24] sm:$0xf]
    %v103 = vld [vmem:[#allocation5 + $0x28] sm:$0xf]
    %v104 = vld [vmem:[#allocation5 + $0x2c] sm:$0xf]
    %v105 = vld [vmem:[#allocation5 + $0x30] sm:$0xf]
    %v106 = vld [vmem:[#allocation5 + $0x34] sm:$0xf]
    %v107 = vld [vmem:[#allocation5 + $0x38] sm:$0xf]
    %v108 = vld [vmem:[#allocation5 + $0x3c] sm:$0xf]
    %v125 = vunpack.c.l.b16 %v93
    %v126 = vunpack.c.l.b16 %v94
    %v127 = vunpack.c.l.b16 %v95
    %v128 = vunpack.c.l.b16 %v96
    %v129 = vunpack.c.l.b16 %v97
    %v130 = vunpack.c.l.b16 %v98
    %v131 = vunpack.c.l.b16 %v99
    %v132 = vunpack.c.l.b16 %v100
    %v133 = vunpack.c.l.b16 %v101
    %v134 = vunpack.c.l.b16 %v102
    %v135 = vunpack.c.l.b16 %v103
    %v136 = vunpack.c.l.b16 %v104
    %v137 = vunpack.c.l.b16 %v105
    %v138 = vunpack.c.l.b16 %v106
    %v139 = vunpack.c.l.b16 %v107
    %v140 = vunpack.c.l.b16 %v108
    %v141 = vpack.c.b16 %v126, %v125
    %v142 = vpack.c.b16 %v128, %v127
    %v143 = vpack.c.b16 %v130, %v129
    %v144 = vpack.c.b16 %v132, %v131
    %v145 = vpack.c.b16 %v134, %v133
    %v146 = vpack.c.b16 %v136, %v135
    %v147 = vpack.c.b16 %v138, %v137
    %v148 = vpack.c.b16 %v140, %v139
    %157 = vmatpush.bf16.msra.mxu0 %v148
    %158 = vmatpush.bf16.msra.mxu0 %v147
    %159 = vmatpush.bf16.msra.mxu0 %v146
    %160 = vmatpush.bf16.msra.mxu0 %v145
    %161 = vmatpush.bf16.msra.mxu0 %v144
    %162 = vmatpush.bf16.msra.mxu0 %v143
    %163 = vmatpush.bf16.msra.mxu0 %v142
    %164 = vmatpush.bf16.msra.mxu0 %v141
    %165 = vmatmul.bf16.gmra.mxu0 %v92
    %v166 = vpop.f32.mrf.mxu0
    %v167 = vadd.f32 0.0, %v166
    %v168 = vpop.f32.mrf.mxu0
    %169 = vdwg.mxu0
    %v170 = vtanh.pop %v167
    %v171 = vld [vmem:[%s6] sm:$0x1]
    %v173 = vperm.slane %v171, 0
    %v175 = vmul.f32 %v170, %v173
    %176 = vadd.xlane.f32.xlu0 %v175
    %v177 = vpop.xlane.xlu0 %176
    %v178 = vld [vmem:[%s2] sm:$0xff]
    %s179 = sld [smem:[#allocation2]]
    %v180 = vstv %s179
    %v181 = vmul.f32 %v178, %v180
    %v182 = vadd.f32 %v177, %v181
    %vm183 = vcmask 7168
    %184 = vst.msk [vmem:[%s7] sm:$0xff] %vm183, %v182
    // Predicated region
    $region38: #{tpu_custom_call.1} parent=1 // pred_check
      _
    $region39: #{tpu_custom_call.1} parent=1 // pred_check_branch
      %186 = sbr.rel (0) target = $region41
    $region40: #{tpu_custom_call.1} parent=1 // pred_region
      _
    $region41: #{tpu_custom_call.1} parent=1 // pred_fallthru
      _
    // Predicated region
    $region42: #{tpu_custom_call.1} parent=1 // pred_check
      _
    $region43: #{tpu_custom_call.1} parent=1 // pred_check_branch
      %188 = sbr.rel (0) target = $region45
    $region44: #{tpu_custom_call.1} parent=1 // pred_region
      _
    $region45: #{tpu_custom_call.1} parent=1 // pred_fallthru
      _
    %189 = vsyncpa [#allocation4], 1
    %190 = vsyncpa [#allocation6], 1

</llo_original>
